<compile_context>
chip_gen: v7x
topology: tpu7x:2x2x1
jax: 0.10.0
libtpu: 0.0.40
codegen_flags: <defaults>
</compile_context>

<pallas_src>
import math

import jax
import jax.numpy as jnp
from jax import lax
from jax.experimental import pallas as pl
from jax.experimental.pallas import tpu as pltpu


_NEG_BIG = -1e30                      # finite "-inf" for padded vocab lanes (no inf-inf NaNs)
_VMEM_LIMIT = 48 * 1024 * 1024        # > 16/32 MiB scoped defaults, headroom under v7x 64 MiB


def _round_up(x, m):
    return (x + m - 1) // m * m


# ---------------------------------------------------------------------------
# Kernel 1: logits = X @ W^T + b (accumulated in the f32 output block) plus
# online per-token-row max / sum-exp across vocab tiles.
# ---------------------------------------------------------------------------
def _logits_stats_kernel(x_ref, w_ref, b_ref, logits_ref, m_ref, l_ref):
    j = pl.program_id(1)              # vocab tile
    k = pl.program_id(2)              # d_model (reduction) tile
    nk = pl.num_programs(2)

    @pl.when(jnp.logical_and(j == 0, k == 0))
    def _init_stats():
        m_ref[...] = jnp.full_like(m_ref, _NEG_BIG)
        l_ref[...] = jnp.zeros_like(l_ref)

    @pl.when(k == 0)
    def _init_logits():
        # Initialise the resident accumulator (the output block itself) with the bias.
        logits_ref[...] = jnp.broadcast_to(b_ref[...], logits_ref.shape)

    # (tm, tk) x (tv, tk) -> (tm, tv): contract the shared d_model axis (A @ B^T form,
    # so W stays in (V, D) layout); bf16 MXU operands, f32 accumulation.
    logits_ref[...] += lax.dot_general(
        x_ref[...], w_ref[...],
        dimension_numbers=(((1,), (1,)), ((), ())),
        preferred_element_type=jnp.float32,
    )

    @pl.when(k == nk - 1)
    def _update_stats():
        logits = logits_ref[...]
        m_prev = m_ref[...]
        m_new = jnp.maximum(m_prev, jnp.max(logits, axis=-1, keepdims=True))
        l_ref[...] = l_ref[...] * jnp.exp(m_prev - m_new) + jnp.sum(
            jnp.exp(logits - m_new), axis=-1, keepdims=True
        )
        m_ref[...] = m_new


# ---------------------------------------------------------------------------
# Kernel 2: probs = exp(logits - m) * (1 / l)
# ---------------------------------------------------------------------------
def _normalize_kernel(logits_ref, m_ref, l_ref, out_ref):
    inv_l = pl.reciprocal(l_ref[...], approx=True)        # EUP slot, not VALU divide
    out_ref[...] = (jnp.exp(logits_ref[...] - m_ref[...]) * inv_l).astype(out_ref.dtype)


def unembedding_forward(X, W, b, *, tm_max=256, tv_max=4096, tk_max=512):
    """softmax(X @ W^T + b, axis=-1).

    X: (B, N, D); W: (V, D); b: (V,).  Returns (B, N, V) float32.
    X / W feed the MXU as bf16 with f32 accumulation; for best performance store W
    in bfloat16 so the wrapper never does a per-call cast pass over the weights.
    """
    B, N, D = X.shape
    V, D2 = W.shape
    assert D == D2 and b.shape == (V,)
    M = B * N

    # ---- tile sizes -------------------------------------------------------
    m_pad8 = _round_up(M, 8)
    tm = min(tm_max, m_pad8)
    tm = max(8, tm - tm % 8)
    if m_pad8 // tm < 2 and m_pad8 >= 16:
        # v7x megacore: ensure >= 2 tiles on the "parallel" token axis.
        tm = _round_up(pl.cdiv(m_pad8, 2), 8)
    m_pad = _round_up(m_pad8, tm)

    v_pad128 = _round_up(V, 128)
    tv = min(tv_max, v_pad128)
    tv = max(128, tv - tv % 128)
    v_pad = _round_up(v_pad128, tv)

    d_pad = _round_up(D, 128)
    tk = min(tk_max, d_pad)
    tk = max(128, tk - tk % 128)
    while d_pad % tk:                 # largest multiple of 128 (<= tk_max) dividing d_pad
        tk -= 128

    # ---- operands ---------------------------------------------------------
    x = X.reshape(M, D)
    if x.dtype != jnp.bfloat16:
        x = x.astype(jnp.bfloat16)
    w = W if W.dtype == jnp.bfloat16 else W.astype(jnp.bfloat16)
    bias = b.astype(jnp.float32)

    # Zero-pad token rows / d_model cols (numerically inert); padded vocab rows get
    # zero weights and a hugely negative bias so exp underflows to exactly 0.
    # TODO(synk): in a real model, pre-pad / pre-cast W and b once at init time.
    if (m_pad, d_pad) != (M, D):
        x = jnp.pad(x, ((0, m_pad - M), (0, d_pad - D)))
    if (v_pad, d_pad) != (V, D):
        w = jnp.pad(w, ((0, v_pad - V), (0, d_pad - D)))
    if v_pad != V:
        bias = jnp.pad(bias, (0, v_pad - V), constant_values=_NEG_BIG)
    bias2 = bias.reshape(1, v_pad)

    gm, gv, gk = m_pad // tm, v_pad // tv, d_pad // tk

    # ---- pass 1: logits + online row stats --------------------------------
    logits, m_rows, l_rows = pl.pallas_call(
        _logits_stats_kernel,
        out_shape=(
            jax.ShapeDtypeStruct((m_pad, v_pad), jnp.float32),
            jax.ShapeDtypeStruct((m_pad, 1), jnp.float32),
            jax.ShapeDtypeStruct((m_pad, 1), jnp.float32),
        ),
        grid_spec=pltpu.PrefetchScalarGridSpec(
            num_scalar_prefetch=0,
            grid=(gm, gv, gk),
            in_specs=[
                pl.BlockSpec((tm, tk), lambda i, j, k: (i, k)),   # X tile
                pl.BlockSpec((tv, tk), lambda i, j, k: (j, k)),   # W tile, natural (V, D)
                pl.BlockSpec((1, tv), lambda i, j, k: (0, j)),    # bias tile
            ],
            out_specs=(
                pl.BlockSpec((tm, tv), lambda i, j, k: (i, j)),   # logits (resident over k)
                pl.BlockSpec((tm, 1), lambda i, j, k: (i, 0)),    # running max (resident j,k)
                pl.BlockSpec((tm, 1), lambda i, j, k: (i, 0)),    # running sum-exp
            ),
        ),
        compiler_params=pltpu.CompilerParams(
            dimension_semantics=("parallel", "arbitrary", "arbitrary"),
            vmem_limit_bytes=_VMEM_LIMIT,
        ),
        cost_estimate=pl.CostEstimate(
            flops=2 * M * V * D,
            transcendentals=M * V,
            bytes_accessed=M * D * 2 + gm * V * D * 2 + M * V * 4,
        ),
    )(x, w, bias2)

    # ---- pass 2: normalise -------------------------------------------------
    probs = pl.pallas_call(
        _normalize_kernel,
        out_shape=jax.ShapeDtypeStruct((m_pad, v_pad), jnp.float32),
        grid_spec=pltpu.PrefetchScalarGridSpec(
            num_scalar_prefetch=0,
            grid=(gm, gv),
            in_specs=[
                pl.BlockSpec((tm, tv), lambda i, j: (i, j)),
                pl.BlockSpec((tm, 1), lambda i, j: (i, 0)),
                pl.BlockSpec((tm, 1), lambda i, j: (i, 0)),
            ],
            out_specs=pl.BlockSpec((tm, tv), lambda i, j: (i, j)),
        ),
        compiler_params=pltpu.CompilerParams(
            dimension_semantics=("parallel", "parallel"),
            vmem_limit_bytes=_VMEM_LIMIT,
        ),
        cost_estimate=pl.CostEstimate(
            flops=2 * M * V,
            transcendentals=M * V,
            bytes_accessed=3 * M * V * 4,
        ),
    )(logits, m_rows, l_rows)

    # TODO(synk): optionally emit bf16 probabilities (or fused log-probs) if the
    # consumer allows -- halves the M*V output bandwidth.
    return probs[:M, :V].reshape(B, N, V)


if __name__ == "__main__":
    VOCAB_SZ = 320     # deliberately NOT a multiple of 128 -> exercises vocab padding/masking
    D_MODEL = 256
    BATCH = 2
    SEQ = 8

    key = jax.random.PRNGKey(0)
    k_x, k_w, k_b = jax.random.split(key, 3)

    # Deterministic synthetic parameters (nn.Linear(d_model, vocab_sz)-like).
    X = jax.random.normal(k_x, (BATCH, SEQ, D_MODEL), dtype=jnp.float32)
    W = jax.random.normal(k_w, (VOCAB_SZ, D_MODEL), dtype=jnp.float32) / math.sqrt(D_MODEL)
    b = jax.random.normal(k_b, (VOCAB_SZ,), dtype=jnp.float32) * 0.1

    # Weights stored bf16 (no per-call weight cast/transpose inside the forward).
    W_bf16 = W.astype(jnp.bfloat16)

    # Default tiles (single vocab / d tile at these shapes)...
    out = unembedding_forward(X, W_bf16, b)
    out = jax.block_until_ready(out)
    # ...and deliberately tiny tiles so the multi-tile online-softmax path is exercised
    # (2 token x 3 vocab x 2 d_model tiles, with ragged vocab padding).
    out_tiled = unembedding_forward(X, W_bf16, b, tm_max=8, tv_max=128, tk_max=128)
    out_tiled = jax.block_until_ready(out_tiled)

    # Reference: full-precision linear + softmax. bf16 MXU operands change numerics
    # slightly (flagged in the review), hence the loosened tolerance.
    logits_ref = jnp.einsum(
        "bnd,vd->bnv", X, W, precision=lax.Precision.HIGHEST
    ) + b
    ref = jax.nn.softmax(logits_ref, axis=-1)

    assert out.shape == (BATCH, SEQ, VOCAB_SZ), out.shape
    assert jnp.allclose(out, ref, atol=1e-2), "mismatch vs reference"
    assert jnp.allclose(out_tiled, ref, atol=1e-2), "tiled mismatch vs reference"
    # Rows should sum to ~1 (approx reciprocal in the finalize).
    assert jnp.allclose(jnp.sum(out, axis=-1), 1.0, atol=5e-3), "softmax rows != 1"
    assert jnp.allclose(jnp.sum(out_tiled, axis=-1), 1.0, atol=5e-3), "softmax rows != 1"

    print("KERNEL_OK")
</pallas_src>

<mosaic_0001>
module attributes {stable_mosaic.version = 11 : i64} {
  func.func @_logits_stats_kernel(%arg0: i32, %arg1: i32, %arg2: i32, %arg3: memref<8x256xbf16, #tpu.memory_space<vmem>>, %arg4: memref<384x256xbf16, #tpu.memory_space<vmem>>, %arg5: memref<1x384xf32, #tpu.memory_space<vmem>>, %arg6: memref<8x384xf32, #tpu.memory_space<vmem>>, %arg7: memref<8x1xf32, #tpu.memory_space<vmem>>, %arg8: memref<8x1xf32, #tpu.memory_space<vmem>>) attributes {dimension_semantics = [#tpu.dimension_semantics<parallel>, #tpu.dimension_semantics<arbitrary>, #tpu.dimension_semantics<arbitrary>], iteration_bounds = array<i64: 2, 1, 1>, scalar_prefetch = 0 : i64, scratch_operands = 0 : i64, tpu.core_type = #tpu.core_type<tc>, window_params = [{transform_indices = @transform_0, window_bounds = array<i64: 8, 256>}, {transform_indices = @transform_1, window_bounds = array<i64: 384, 256>}, {transform_indices = @transform_2, window_bounds = array<i64: 1, 384>}, {transform_indices = @transform_3, window_bounds = array<i64: 8, 384>}, {transform_indices = @transform_4, window_bounds = array<i64: 8, 1>}, {transform_indices = @transform_5, window_bounds = array<i64: 8, 1>}]} {
    %c0_i32 = arith.constant 0 : i32
    %0 = arith.cmpi eq, %arg1, %c0_i32 : i32
    %c0_i32_0 = arith.constant 0 : i32
    %1 = arith.cmpi eq, %arg2, %c0_i32_0 : i32
    %2 = arith.andi %0, %1 : i1
    %3 = arith.extui %2 : i1 to i32
    %c0_i32_1 = arith.constant 0 : i32
    %4 = arith.cmpi ne, %3, %c0_i32_1 : i32
    scf.if %4 {
      %cst_13 = arith.constant -1.000000e+30 : f32
      %17 = vector.broadcast %cst_13 : f32 to vector<8x1xf32>
      %c0_14 = arith.constant 0 : index
      %c0_15 = arith.constant 0 : index
      %18 = vector.load %arg7[%c0_14, %c0_15] : memref<8x1xf32, #tpu.memory_space<vmem>>, vector<8x1xf32>
      tpu.vector_store %arg7[%c0_14, %c0_15], %17 {strides = array<i32>} : memref<8x1xf32, #tpu.memory_space<vmem>>, vector<8x1xf32>,
      %cst_16 = arith.constant 0.000000e+00 : f32
      %19 = vector.broadcast %cst_16 : f32 to vector<8x1xf32>
      %c0_17 = arith.constant 0 : index
      %c0_18 = arith.constant 0 : index
      %20 = vector.load %arg8[%c0_17, %c0_18] : memref<8x1xf32, #tpu.memory_space<vmem>>, vector<8x1xf32>
      tpu.vector_store %arg8[%c0_17, %c0_18], %19 {strides = array<i32>} : memref<8x1xf32, #tpu.memory_space<vmem>>, vector<8x1xf32>,
    } else {
    }
    %c0_i32_2 = arith.constant 0 : i32
    %5 = arith.cmpi eq, %arg2, %c0_i32_2 : i32
    %6 = arith.extui %5 : i1 to i32
    %c0_i32_3 = arith.constant 0 : i32
    %7 = arith.cmpi ne, %6, %c0_i32_3 : i32
    scf.if %7 {
      %c0_13 = arith.constant 0 : index
      %c0_14 = arith.constant 0 : index
      %17 = vector.load %arg5[%c0_13, %c0_14] : memref<1x384xf32, #tpu.memory_space<vmem>>, vector<1x384xf32>
      %18 = vector.shape_cast %17 : vector<1x384xf32> to vector<1x384xf32>
      %19 = vector.broadcast %18 : vector<1x384xf32> to vector<8x384xf32>
      %c0_15 = arith.constant 0 : index
      %c0_16 = arith.constant 0 : index
      %20 = vector.load %arg6[%c0_15, %c0_16] : memref<8x384xf32, #tpu.memory_space<vmem>>, vector<8x384xf32>
      tpu.vector_store %arg6[%c0_15, %c0_16], %19 {strides = array<i32>} : memref<8x384xf32, #tpu.memory_space<vmem>>, vector<8x384xf32>,
    } else {
    }
    %c0 = arith.constant 0 : index
    %c0_4 = arith.constant 0 : index
    %8 = vector.load %arg6[%c0, %c0_4] : memref<8x384xf32, #tpu.memory_space<vmem>>, vector<8x384xf32>
    %c0_5 = arith.constant 0 : index
    %c0_6 = arith.constant 0 : index
    %9 = vector.load %arg3[%c0_5, %c0_6] : memref<8x256xbf16, #tpu.memory_space<vmem>>, vector<8x256xbf16>
    %c0_7 = arith.constant 0 : index
    %c0_8 = arith.constant 0 : index
    %10 = vector.load %arg4[%c0_7, %c0_8] : memref<384x256xbf16, #tpu.memory_space<vmem>>, vector<384x256xbf16>
    %cst = arith.constant dense<0.000000e+00> : vector<8x384xf32>
    %11 = tpu.matmul %9, %10, %cst {dimension_numbers = #tpu.dot_dimension_numbers<[1], [1], [0], [0], [0, 0, 1, 0], [], []>} : vector<8x256xbf16>, vector<384x256xbf16>, vector<8x384xf32> -> vector<8x384xf32>
    %12 = arith.addf %8, %11 : vector<8x384xf32>
    %c0_9 = arith.constant 0 : index
    %c0_10 = arith.constant 0 : index
    %13 = vector.load %arg6[%c0_9, %c0_10] : memref<8x384xf32, #tpu.memory_space<vmem>>, vector<8x384xf32>
    tpu.vector_store %arg6[%c0_9, %c0_10], %12 {strides = array<i32>} : memref<8x384xf32, #tpu.memory_space<vmem>>, vector<8x384xf32>,
    %c0_i32_11 = arith.constant 0 : i32
    %14 = arith.cmpi eq, %arg2, %c0_i32_11 : i32
    %15 = arith.extui %14 : i1 to i32
    %c0_i32_12 = arith.constant 0 : i32
    %16 = arith.cmpi ne, %15, %c0_i32_12 : i32
    scf.if %16 {
      %c0_13 = arith.constant 0 : index
      %c0_14 = arith.constant 0 : index
      %17 = vector.load %arg6[%c0_13, %c0_14] : memref<8x384xf32, #tpu.memory_space<vmem>>, vector<8x384xf32>
      %c0_15 = arith.constant 0 : index
      %c0_16 = arith.constant 0 : index
      %18 = vector.load %arg7[%c0_15, %c0_16] : memref<8x1xf32, #tpu.memory_space<vmem>>, vector<8x1xf32>
      %cst_17 = arith.constant dense<0xFF800000> : vector<8xf32>
      %19 = vector.multi_reduction <maximumf>, %17, %cst_17 [1] : vector<8x384xf32> to vector<8xf32>
      %20 = vector.shape_cast %19 : vector<8xf32> to vector<8x1xf32>
      %21 = arith.maximumf %18, %20 : vector<8x1xf32>
      %c0_18 = arith.constant 0 : index
      %c0_19 = arith.constant 0 : index
      %22 = vector.load %arg8[%c0_18, %c0_19] : memref<8x1xf32, #tpu.memory_space<vmem>>, vector<8x1xf32>
      %23 = arith.subf %18, %21 : vector<8x1xf32>
      %24 = math.exp %23 : vector<8x1xf32>
      %25 = arith.mulf %22, %24 : vector<8x1xf32>
      %26 = vector.broadcast %21 : vector<8x1xf32> to vector<8x384xf32>
      %27 = arith.subf %17, %26 : vector<8x384xf32>
      %28 = math.exp %27 : vector<8x384xf32>
      %cst_20 = arith.constant dense<0.000000e+00> : vector<8xf32>
      %29 = vector.multi_reduction <add>, %28, %cst_20 [1] : vector<8x384xf32> to vector<8xf32>
      %30 = vector.shape_cast %29 : vector<8xf32> to vector<8x1xf32>
      %31 = arith.addf %25, %30 : vector<8x1xf32>
      %c0_21 = arith.constant 0 : index
      %c0_22 = arith.constant 0 : index
      %32 = vector.load %arg8[%c0_21, %c0_22] : memref<8x1xf32, #tpu.memory_space<vmem>>, vector<8x1xf32>
      tpu.vector_store %arg8[%c0_21, %c0_22], %31 {strides = array<i32>} : memref<8x1xf32, #tpu.memory_space<vmem>>, vector<8x1xf32>,
      %c0_23 = arith.constant 0 : index
      %c0_24 = arith.constant 0 : index
      %33 = vector.load %arg7[%c0_23, %c0_24] : memref<8x1xf32, #tpu.memory_space<vmem>>, vector<8x1xf32>
      tpu.vector_store %arg7[%c0_23, %c0_24], %21 {strides = array<i32>} : memref<8x1xf32, #tpu.memory_space<vmem>>, vector<8x1xf32>,
    } else {
    }
    return
  }
  func.func @transform_0(%arg0: i32, %arg1: i32, %arg2: i32) -> (i32, i32) {
    %c0_i32 = arith.constant 0 : i32
    return %arg0, %arg2 : i32, i32
  }
  func.func @transform_1(%arg0: i32, %arg1: i32, %arg2: i32) -> (i32, i32) {
    %c0_i32 = arith.constant 0 : i32
    return %arg1, %arg2 : i32, i32
  }
  func.func @transform_2(%arg0: i32, %arg1: i32, %arg2: i32) -> (i32, i32) {
    %c0_i32 = arith.constant 0 : i32
    %c0_i32_0 = arith.constant 0 : i32
    return %c0_i32, %arg1 : i32, i32
  }
  func.func @transform_3(%arg0: i32, %arg1: i32, %arg2: i32) -> (i32, i32) {
    %c0_i32 = arith.constant 0 : i32
    return %arg0, %arg1 : i32, i32
  }
  func.func @transform_4(%arg0: i32, %arg1: i32, %arg2: i32) -> (i32, i32) {
    %c0_i32 = arith.constant 0 : i32
    %c0_i32_0 = arith.constant 0 : i32
    return %arg0, %c0_i32 : i32, i32
  }
  func.func @transform_5(%arg0: i32, %arg1: i32, %arg2: i32) -> (i32, i32) {
    %c0_i32 = arith.constant 0 : i32
    %c0_i32_0 = arith.constant 0 : i32
    return %arg0, %c0_i32 : i32, i32
  }
}

</mosaic_0001>

<llo_original>
// kernel: tpu_custom_call.1
$region0: #{tpu_custom_call.1}
  #allocation0 [shape = 'u32[]', space=smem, size = 0x4, offset = 0x4, fixed_abs, tag = 'smem constant byte address 0x4 - core index']
  #allocation1 [shape = 'u32[144,128]{1,0:T(1,128)}', space=vmem, size = 0x12000, scoped, tag = 'internal scratch']
  %s0 = inlined_call_operand.hbm [shape: bf16[16,256], index: 0, kind: input, shape index: {}]
  %s1 = inlined_call_operand.hbm [shape: bf16[384,256], index: 1, kind: input, shape index: {}]
  %s2 = inlined_call_operand.vmem [shape: f32[1,384], index: 2, kind: input, shape index: {}]
  %s3 = inlined_call_operand.hbm [shape: f32[16,384], index: 3, kind: output, shape index: {0}]
  %s4 = inlined_call_operand.vmem [shape: f32[16,1], index: 4, kind: output, shape index: {1}]
  %s5 = inlined_call_operand.vmem [shape: f32[16,1], index: 5, kind: output, shape index: {2}]
  %6 = xla_tuple %s3, %s4, %s5
  %s7 = sld [smem:[#allocation0]]
  $region81: #{tpu_custom_call.1} parent=0
    _
  %s9 = ssub.s32 1, %s7
  %s10 = scalar_select 0, %s9, %s7
  $region1: #{tpu_custom_call.1} parent=0
    #allocation2 [shape = 'u8[8192]{0}', space=vmem, size = 0x2000, scoped, tag = 'input window, operand 0']
    #allocation3 [shape = 's32[2]{0}', space=sflag, size = 0x8, scoped, tag = 'scoped memory for tpu_custom_call.1']
    #allocation4 [shape = 's32[2]{0}', space=sflag, size = 0x8, scoped, tag = 'scoped memory for tpu_custom_call.1']
    #allocation5 [shape = 'u8[196608]{0}', space=vmem, size = 0x30000, scoped, tag = 'input window, operand 1, single buffered']
    #allocation6 [shape = 's32[1]{0}', space=sflag, size = 0x4, scoped, tag = 'scoped memory for tpu_custom_call.1']
    #allocation7 [shape = 'u8[24576]{0}', space=vmem, size = 0x6000, scoped, tag = 'output window, operand 0']
    %11 = vsyncpa [#allocation3], 0
    %s12 = scalar_lea.sflag [#allocation3], 1
    %13 = vsyncpa %s12, 0
    %14 = vsyncpa [#allocation6], 0
    %15 = vsyncpa [#allocation4], 0
    %s16 = scalar_lea.sflag [#allocation4], 1
    %17 = vsyncpa %s16, 0
    loop: start=0, step=1, limit=4
    $region2: #{tpu_custom_call.1} parent=1 // loop_pre_header
      _
    $region3: #{tpu_custom_call.1} parent=1 // loop_header
      %s19 = sphi 0, %s23
      %p20 = scmp.ge.s32.totalorder %s19, 4
      %s26 = sphi 0, %s45
      %s27 = sphi 0, %s41
      %s28 = sphi 0, %s37
      %s29 = sphi 0, %s26
      %s30 = sphi 0, %s27
      %s31 = sphi 0, %s28
      %s32 = sphi 0, %s29
      %s33 = sphi 0, %s30
      %s34 = sphi 0, %s31
      %s50 = sphi 0, %s52
      %s53 = sphi 0, %s50
      %s54 = sphi 0, %s53
      %s70 = sphi 0, %s54
      %s78 = sphi 0, %s80
      %s81 = sphi 0, %s78
      %s82 = sphi 0, %s81
      %s98 = sphi 0, %s82
      %s104 = sphi 0, %s106
      %s107 = sphi 0, %s104
      %s108 = sphi 0, %s107
      %s124 = sphi 0, %s108
      %s132 = sphi 0, %s134
      %s135 = sphi 0, %s132
      %s136 = sphi 0, %s135
      %s152 = sphi 0, %s136
      %s158 = sphi 0, %s160
      %s161 = sphi 0, %s158
      %s162 = sphi 0, %s161
      %s178 = sphi 0, %s162
      %s184 = sphi 0, %s186
      %s187 = sphi 0, %s184
      %s188 = sphi 0, %s187
      %s204 = sphi 0, %s188
    $region4: #{tpu_custom_call.1} parent=1 // loop_header_branch
      %22 = sbr.rel (%p20) target = $region8
    $region5: #{tpu_custom_call.1} parent=1 // loop_body
      %s24 = ssub.s32 %s19, 1
      %s25 = ssub.s32 %s19, 2
      %s35 = sadd.s32 1, %s28
      %p36 = scmp.ge.s32.totalorder %s35, 1
      %s37 = scalar_select %p36, 0, %s35
      %s38 = sadd.s32 1, %s27
      %s39 = scalar_select %p36, %s38, %s27
      %p40 = scmp.ge.s32.totalorder %s39, 1
      %s41 = scalar_select %p40, 0, %s39
      %s42 = sadd.s32 1, %s26
      %s43 = scalar_select %p40, %s42, %s26
      %p44 = scmp.ge.s32.totalorder %s43, 2
      %s45 = scalar_select %p44, 0, %s43
      %s46 = ssub.s32 %s26, %s45
      %s47 = ssub.s32 %s28, %s37
      %s48 = sor.u32 %s46, %s47
      %p49 = scmp.eq.s32.totalorder %s48, 0
      %s51 = sadd.s32 %s50, 1
      %s52 = scalar_select %p49, %s50, %s51
      %p55 = pneg %p49
      %p56 = scmp.eq.s32.totalorder %s19, 1
      %p57 = por %p55, %p56
      %p58 = scmp.ne.s32.totalorder %s50, %s53
      %p59 = scmp.eq.s32.totalorder %s19, 0
      %p60 = por %p58, %p59
      %p61 = scmp.ne.s32.totalorder %s50, %s53
      %p62 = scmp.eq.s32.totalorder %s24, 1
      %p63 = por %p61, %p62
      %p64 = scmp.ne.s32.totalorder %s53, %s54
      %p65 = scmp.eq.s32.totalorder %s24, 0
      %p66 = por %p64, %p65
      %p67 = scmp.ne.s32.totalorder %s53, %s54
      %p68 = scmp.eq.s32.totalorder %s25, 1
      %p69 = por %p67, %p68
      %p71 = scmp.ne.s32.totalorder %s54, %s70
      %p72 = scmp.eq.s32.totalorder %s25, 0
      %p73 = por %p71, %p72
      %s74 = ssub.s32 %s27, %s41
      %s75 = ssub.s32 %s28, %s37
      %s76 = sor.u32 %s74, %s75
      %p77 = scmp.eq.s32.totalorder %s76, 0
      %s79 = sadd.s32 %s78, 1
      %s80 = scalar_select %p77, %s78, %s79
      %p83 = pneg %p77
      %p84 = scmp.eq.s32.totalorder %s19, 1
      %p85 = por %p83, %p84
      %p86 = scmp.ne.s32.totalorder %s78, %s81
      %p87 = scmp.eq.s32.totalorder %s19, 0
      %p88 = por %p86, %p87
      %p89 = scmp.ne.s32.totalorder %s78, %s81
      %p90 = scmp.eq.s32.totalorder %s24, 1
      %p91 = por %p89, %p90
      %p92 = scmp.ne.s32.totalorder %s81, %s82
      %p93 = scmp.eq.s32.totalorder %s24, 0
      %p94 = por %p92, %p93
      %p95 = scmp.ne.s32.totalorder %s81, %s82
      %p96 = scmp.eq.s32.totalorder %s25, 1
      %p97 = por %p95, %p96
      %p99 = scmp.ne.s32.totalorder %s82, %s98
      %p100 = scmp.eq.s32.totalorder %s25, 0
      %p101 = por %p99, %p100
      %s102 = ssub.s32 %s27, %s41
      %p103 = scmp.eq.s32.totalorder %s102, 0
      %s105 = sadd.s32 %s104, 1
      %s106 = scalar_select %p103, %s104, %s105
      %p109 = pneg %p103
      %p110 = scmp.eq.s32.totalorder %s19, 1
      %p111 = por %p109, %p110
      %p112 = scmp.ne.s32.totalorder %s104, %s107
      %p113 = scmp.eq.s32.totalorder %s19, 0
      %p114 = por %p112, %p113
      %p115 = scmp.ne.s32.totalorder %s104, %s107
      %p116 = scmp.eq.s32.totalorder %s24, 1
      %p117 = por %p115, %p116
      %p118 = scmp.ne.s32.totalorder %s107, %s108
      %p119 = scmp.eq.s32.totalorder %s24, 0
      %p120 = por %p118, %p119
      %p121 = scmp.ne.s32.totalorder %s107, %s108
      %p122 = scmp.eq.s32.totalorder %s25, 1
      %p123 = por %p121, %p122
      %p125 = scmp.ne.s32.totalorder %s108, %s124
      %p126 = scmp.eq.s32.totalorder %s25, 0
      %p127 = por %p125, %p126
      %s128 = ssub.s32 %s26, %s45
      %s129 = ssub.s32 %s27, %s41
      %s130 = sor.u32 %s128, %s129
      %p131 = scmp.eq.s32.totalorder %s130, 0
      %s133 = sadd.s32 %s132, 1
      %s134 = scalar_select %p131, %s132, %s133
      %p137 = pneg %p131
      %p138 = scmp.eq.s32.totalorder %s19, 1
      %p139 = por %p137, %p138
      %p140 = scmp.ne.s32.totalorder %s132, %s135
      %p141 = scmp.eq.s32.totalorder %s19, 0
      %p142 = por %p140, %p141
      %p143 = scmp.ne.s32.totalorder %s132, %s135
      %p144 = scmp.eq.s32.totalorder %s24, 1
      %p145 = por %p143, %p144
      %p146 = scmp.ne.s32.totalorder %s135, %s136
      %p147 = scmp.eq.s32.totalorder %s24, 0
      %p148 = por %p146, %p147
      %p149 = scmp.ne.s32.totalorder %s135, %s136
      %p150 = scmp.eq.s32.totalorder %s25, 1
      %p151 = por %p149, %p150
      %p153 = scmp.ne.s32.totalorder %s136, %s152
      %p154 = scmp.eq.s32.totalorder %s25, 0
      %p155 = por %p153, %p154
      %s156 = ssub.s32 %s26, %s45
      %p157 = scmp.eq.s32.totalorder %s156, 0
      %s159 = sadd.s32 %s158, 1
      %s160 = scalar_select %p157, %s158, %s159
      %p163 = pneg %p157
      %p164 = scmp.eq.s32.totalorder %s19, 1
      %p165 = por %p163, %p164
      %p166 = scmp.ne.s32.totalorder %s158, %s161
      %p167 = scmp.eq.s32.totalorder %s19, 0
      %p168 = por %p166, %p167
      %p169 = scmp.ne.s32.totalorder %s158, %s161
      %p170 = scmp.eq.s32.totalorder %s24, 1
      %p171 = por %p169, %p170
      %p172 = scmp.ne.s32.totalorder %s161, %s162
      %p173 = scmp.eq.s32.totalorder %s24, 0
      %p174 = por %p172, %p173
      %p175 = scmp.ne.s32.totalorder %s161, %s162
      %p176 = scmp.eq.s32.totalorder %s25, 1
      %p177 = por %p175, %p176
      %p179 = scmp.ne.s32.totalorder %s162, %s178
      %p180 = scmp.eq.s32.totalorder %s25, 0
      %p181 = por %p179, %p180
      %s182 = ssub.s32 %s26, %s45
      %p183 = scmp.eq.s32.totalorder %s182, 0
      %s185 = sadd.s32 %s184, 1
      %s186 = scalar_select %p183, %s184, %s185
      %p189 = pneg %p183
      %p190 = scmp.eq.s32.totalorder %s19, 1
      %p191 = por %p189, %p190
      %p192 = scmp.ne.s32.totalorder %s184, %s187
      %p193 = scmp.eq.s32.totalorder %s19, 0
      %p194 = por %p192, %p193
      %p195 = scmp.ne.s32.totalorder %s184, %s187
      %p196 = scmp.eq.s32.totalorder %s24, 1
      %p197 = por %p195, %p196
      %p198 = scmp.ne.s32.totalorder %s187, %s188
      %p199 = scmp.eq.s32.totalorder %s24, 0
      %p200 = por %p198, %p199
      %p201 = scmp.ne.s32.totalorder %s187, %s188
      %p202 = scmp.eq.s32.totalorder %s25, 1
      %p203 = por %p201, %p202
      %p205 = scmp.ne.s32.totalorder %s188, %s204
      %p206 = scmp.eq.s32.totalorder %s25, 0
      %p207 = por %p205, %p206
      %p208 = scmp.le.s32.totalorder 1, %s19
      %p209 = scmp.lt.s32.totalorder %s19, 3
      %p210 = pnand %p208, %p209
      %p211 = pneg %p210
      // Predicated region
      $region9: #{tpu_custom_call.1} parent=5 // pred_check
        _
      $region10: #{tpu_custom_call.1} parent=5 // pred_check_branch
        %213 = sbr.rel (%p210) target = $region12
      $region11: #{tpu_custom_call.1} parent=5 // pred_region
        %s214 = ssub.s32 %s19, 1
        // Predicated region
        $region13: #{tpu_custom_call.1} parent=11 // pred_check
          %p215 = pneg %p94
        $region14: #{tpu_custom_call.1} parent=11 // pred_check_branch
          %217 = sbr.rel (%p215) target = $region16
        $region15: #{tpu_custom_call.1} parent=11 // pred_region
          %s218 = smul.u32 48, %s30
          %s219 = smul.u32 2, %s31
          %s221 = ssub.s32 6144, 6144
          %222 = vsyncadd [#allocation6], %s221
          %s223 = smul.addr %s218, 2
          %s224 = sadd.s32 %s219, %s223
          %s225 = smul.addr %s224, 64
          %s226 = scalar_lea.hbm %s1, %s225
          %s227 = sshll.u32 [#allocation5], 4
          %s228 = int_to_ptr.vmem [resolvable:$true] %s227
          %233 = dma.hbm_to_vmem [thread:$0]  %s226, 6144, %s228, [#allocation6], 128, 128, 8
        $region16: #{tpu_custom_call.1} parent=11 // pred_fallthru
          _
        // Predicated region
        $region17: #{tpu_custom_call.1} parent=11 // pred_check
          %p234 = pneg %p120
        $region18: #{tpu_custom_call.1} parent=11 // pred_check_branch
          %236 = sbr.rel (%p234) target = $region20
        $region19: #{tpu_custom_call.1} parent=11 // pred_region
          %s237 = smul.u32 3, %s30
          %p238 = scmp.lt.s32.totalorder %s237, 2
          %s239 = scalar_select %p238, %s237, 2
          %s240 = scalar_lea.vmem %s2, %s239
          %s241 = smul.u32 3, %s30
        $region20: #{tpu_custom_call.1} parent=11 // pred_fallthru
          _
      $region12: #{tpu_custom_call.1} parent=5 // pred_fallthru
        _
      %p242 = scmp.lt.s32.totalorder %s19, 2
      // Predicated region
      $region21: #{tpu_custom_call.1} parent=5 // pred_check
        %p243 = pneg %p242
      $region22: #{tpu_custom_call.1} parent=5 // pred_check_branch
        %245 = sbr.rel (%p243) target = $region24
      $region23: #{tpu_custom_call.1} parent=5 // pred_region
        // Predicated region
        $region25: #{tpu_custom_call.1} parent=23 // pred_check
          %p246 = pneg %p60
        $region26: #{tpu_custom_call.1} parent=23 // pred_check_branch
          %248 = sbr.rel (%p246) target = $region28
        $region27: #{tpu_custom_call.1} parent=23 // pred_region
          %s249 = sand.u32 %s50, 1
          %s250 = scalar_lea.sflag [#allocation3], %s249
          %s251 = sand.u32 %s50, 1
          %s252 = smul.addr %s251, 8
          %s253 = scalar_lea.vmem [#allocation2], %s252
          %s254 = smul.u32 2, %s28
          %s256 = ssub.s32 128, 128
          %257 = vsyncadd %s250, %s256
          %s258 = smul.addr %s26, 2
          %s259 = sadd.s32 %s254, %s258
          %s260 = smul.addr %s259, 64
          %s261 = scalar_lea.hbm %s0, %s260
          %s263 = sshll.u32 %s253, 4
          %s264 = int_to_ptr.vmem [resolvable:$true] %s263
          %266 = dma.hbm_to_vmem [thread:$0]  %s261, 128, %s264, %s250
        $region28: #{tpu_custom_call.1} parent=23 // pred_fallthru
          _
      $region24: #{tpu_custom_call.1} parent=5 // pred_fallthru
        _
      %p267 = scmp.le.s32.totalorder 1, %s19
      %p268 = scmp.lt.s32.totalorder %s19, 3
      %p269 = pnand %p267, %p268
      %p270 = pneg %p269
      // Predicated region
      $region29: #{tpu_custom_call.1} parent=5 // pred_check
        _
      $region30: #{tpu_custom_call.1} parent=5 // pred_check_branch
        %272 = sbr.rel (%p269) target = $region32
      $region31: #{tpu_custom_call.1} parent=5 // pred_region
        %s273 = ssub.s32 %s19, 1
        %s274 = sand.u32 %s53, 1
        %s275 = scalar_lea.sflag [#allocation3], %s274
        %s276 = sand.u32 %s53, 1
        %s277 = smul.addr %s276, 8
        %s278 = scalar_lea.vmem [#allocation2], %s277
        // Predicated region
        $region33: #{tpu_custom_call.1} parent=31 // pred_check
          %p279 = pneg %p66
        $region34: #{tpu_custom_call.1} parent=31 // pred_check_branch
          %281 = sbr.rel (%p279) target = $region36
        $region35: #{tpu_custom_call.1} parent=31 // pred_region
          %282 = dma.done %s275, 128
        $region36: #{tpu_custom_call.1} parent=31 // pred_fallthru
          _
        // Predicated region
        $region37: #{tpu_custom_call.1} parent=31 // pred_check
          %p283 = pneg %p94
        $region38: #{tpu_custom_call.1} parent=31 // pred_check_branch
          %285 = sbr.rel (%p283) target = $region40
        $region39: #{tpu_custom_call.1} parent=31 // pred_region
          %286 = dma.done [#allocation6], 6144
        $region40: #{tpu_custom_call.1} parent=31 // pred_fallthru
          _
        %s287 = sand.u32 %s53, 1
        %s288 = scalar_lea.sflag [#allocation3], %s287
        %s289 = sand.u32 %s53, 1
        %s290 = smul.addr %s289, 8
        %s291 = scalar_lea.vmem [#allocation2], %s290
        %p292 = pneg %p66
        %p293 = pneg %p63
        %p294 = pneg %p94
        %p295 = pneg %p91
        %s296 = smul.u32 3, %s30
        %p297 = scmp.lt.s32.totalorder %s296, 2
        %s298 = scalar_select %p297, %s296, 2
        %s299 = scalar_lea.vmem %s2, %s298
        %p300 = pneg %p120
        %p301 = pneg %p117
        %p302 = pneg %p148
        %p303 = pneg %p145
        %s304 = sand.u32 %s135, 1
        %s305 = scalar_lea.sflag [#allocation4], %s304
        %s306 = sand.u32 %s135, 1
        %s307 = smul.addr %s306, 24
        %s308 = scalar_lea.vmem [#allocation7], %s307
        %p309 = pneg %p174
        %p310 = pneg %p171
        %p311 = scmp.lt.s32.totalorder %s29, 1
        %s312 = scalar_select %p311, %s29, 1
        %s313 = smul.addr %s312, 8
        %s314 = scalar_lea.vmem %s4, %s313
        %p315 = pneg %p200
        %p316 = pneg %p197
        %p317 = scmp.lt.s32.totalorder %s29, 1
        %s318 = scalar_select %p317, %s29, 1
        %s319 = smul.addr %s318, 8
        %s320 = scalar_lea.vmem %s5, %s319
        %s321 = smul.u32 2, %s31
        %s322 = smul.u32 48, %s30
        %s323 = smul.u32 2, %s31
        %s324 = smul.u32 3, %s30
        %p325 = scmp.lt.s32.totalorder %s324, 2
        %s326 = scalar_select %p325, %s324, 2
        %s327 = scalar_lea.vmem %s2, %s326
        %s328 = smul.u32 3, %s30
        %s329 = smul.u32 3, %s30
        %p330 = scmp.lt.s32.totalorder %s29, 1
        %s331 = scalar_select %p330, %s29, 1
        %s332 = smul.addr %s331, 8
        %s333 = scalar_lea.vmem %s4, %s332
        %p334 = scmp.lt.s32.totalorder %s29, 1
        %s335 = scalar_select %p334, %s29, 1
        %s336 = smul.addr %s335, 8
        %s337 = scalar_lea.vmem %s5, %s336
        %p339 = scmp.eq.s32.totalorder %s30, 0
        %p340 = scmp.eq.s32.totalorder %s31, 0
        %p341 = pnand %p339, %p340
        %p342 = pneg %p341
        // Predicated region
        $region41: #{tpu_custom_call.1} parent=31 // pred_check
          _
        $region42: #{tpu_custom_call.1} parent=31 // pred_check_branch
          %344 = sbr.rel (%p341) target = $region44
        $region43: #{tpu_custom_call.1} parent=31 // pred_region
          %vm345 = vcmask 7168
          %346 = vst.msk [vmem:[%s333] sm:$0xff] %vm345, -1e+30
          %347 = vst.msk [vmem:[%s337] sm:$0xff] %vm345, 0.0
        $region44: #{tpu_custom_call.1} parent=31 // pred_fallthru
          _
        // Predicated region
        $region45: #{tpu_custom_call.1} parent=31 // pred_check
          %p348 = pneg %p340
        $region46: #{tpu_custom_call.1} parent=31 // pred_check_branch
          %350 = sbr.rel (%p348) target = $region48
        $region47: #{tpu_custom_call.1} parent=31 // pred_region
          %v351 = vld [vmem:[%s327] sm:$0x7]
          %v353 = vlaneseq
          %v354 = vshrl.u32 %v353, 7
          %v355 = vsub.s32 0, %v354
          %v356 = vrot.slane %v351, %v355
          %v357 = vlaneseq
          %v358 = vshrl.u32 %v357, 7
          %v359 = vsub.s32 1, %v358
          %v360 = vrot.slane %v351, %v359
          %v361 = vlaneseq
          %v362 = vshrl.u32 %v361, 7
          %v363 = vsub.s32 2, %v362
          %v364 = vrot.slane %v351, %v363
          %368 = vst [vmem:[%s308] sm:$0xff] %v356
          %369 = vst [vmem:[%s308 + $0x8] sm:$0xff] %v360
          %370 = vst [vmem:[%s308 + $0x10] sm:$0xff] %v364
        $region48: #{tpu_custom_call.1} parent=31 // pred_fallthru
          _
        %v371 = vld [vmem:[%s308] sm:$0xff]
        %v372 = vld [vmem:[%s308 + $0x8] sm:$0xff]
        %v373 = vld [vmem:[%s308 + $0x10] sm:$0xff]
        %v374 = vld [vmem:[%s278] sm:$0xff]
        %v375 = vld [vmem:[#allocation5] sm:$0xff]
        %v376 = vld [vmem:[#allocation5 + $0x8] sm:$0xff]
        %v377 = vld [vmem:[#allocation5 + $0x10] sm:$0xff]
        %v378 = vld [vmem:[#allocation5 + $0x18] sm:$0xff]
        %v379 = vld [vmem:[#allocation5 + $0x20] sm:$0xff]
        %v380 = vld [vmem:[#allocation5 + $0x28] sm:$0xff]
        %v381 = vld [vmem:[#allocation5 + $0x30] sm:$0xff]
        %v382 = vld [vmem:[#allocation5 + $0x38] sm:$0xff]
        %v383 = vld [vmem:[#allocation5 + $0x40] sm:$0xff]
        %v384 = vld [vmem:[#allocation5 + $0x48] sm:$0xff]
        %v385 = vld [vmem:[#allocation5 + $0x50] sm:$0xff]
        %v386 = vld [vmem:[#allocation5 + $0x58] sm:$0xff]
        %v387 = vld [vmem:[#allocation5 + $0x60] sm:$0xff]
        %v388 = vld [vmem:[#allocation5 + $0x68] sm:$0xff]
        %v389 = vld [vmem:[#allocation5 + $0x70] sm:$0xff]
        %v390 = vld [vmem:[#allocation5 + $0x78] sm:$0xff]
        %v391 = vld [vmem:[#allocation5 + $0x80] sm:$0xff]
        %v392 = vld [vmem:[#allocation5 + $0x88] sm:$0xff]
        %v393 = vld [vmem:[#allocation5 + $0x90] sm:$0xff]
        %v394 = vld [vmem:[#allocation5 + $0x98] sm:$0xff]
        %v395 = vld [vmem:[#allocation5 + $0xa0] sm:$0xff]
        %v396 = vld [vmem:[#allocation5 + $0xa8] sm:$0xff]
        %v397 = vld [vmem:[#allocation5 + $0xb0] sm:$0xff]
        %v398 = vld [vmem:[#allocation5 + $0xb8] sm:$0xff]
        %v399 = vld [vmem:[#allocation5 + $0xc0] sm:$0xff]
        %v400 = vld [vmem:[#allocation5 + $0xc8] sm:$0xff]
        %v401 = vld [vmem:[#allocation5 + $0xd0] sm:$0xff]
        %v402 = vld [vmem:[#allocation5 + $0xd8] sm:$0xff]
        %v403 = vld [vmem:[#allocation5 + $0xe0] sm:$0xff]
        %v404 = vld [vmem:[#allocation5 + $0xe8] sm:$0xff]
        %v405 = vld [vmem:[#allocation5 + $0xf0] sm:$0xff]
        %v406 = vld [vmem:[#allocation5 + $0xf8] sm:$0xff]
        %v407 = vld [vmem:[#allocation5 + $0x100] sm:$0xff]
        %v408 = vld [vmem:[#allocation5 + $0x108] sm:$0xff]
        %v409 = vld [vmem:[#allocation5 + $0x110] sm:$0xff]
        %v410 = vld [vmem:[#allocation5 + $0x118] sm:$0xff]
        %v411 = vld [vmem:[#allocation5 + $0x120] sm:$0xff]
        %v412 = vld [vmem:[#allocation5 + $0x128] sm:$0xff]
        %v413 = vld [vmem:[#allocation5 + $0x130] sm:$0xff]
        %v414 = vld [vmem:[#allocation5 + $0x138] sm:$0xff]
        %v415 = vld [vmem:[#allocation5 + $0x140] sm:$0xff]
        %v416 = vld [vmem:[#allocation5 + $0x148] sm:$0xff]
        %v417 = vld [vmem:[#allocation5 + $0x150] sm:$0xff]
        %v418 = vld [vmem:[#allocation5 + $0x158] sm:$0xff]
        %v419 = vld [vmem:[#allocation5 + $0x160] sm:$0xff]
        %v420 = vld [vmem:[#allocation5 + $0x168] sm:$0xff]
        %v421 = vld [vmem:[#allocation5 + $0x170] sm:$0xff]
        %v422 = vld [vmem:[#allocation5 + $0x178] sm:$0xff]
        %v424 = vunpack.c.l.b16 %v374
        %v425 = vunpack.c.h.b16 %v374
        %v426 = vpack.c.b16 %v424, %v424
        %v427 = vpack.c.b16 %v425, %v425
        %v478 = vunpack.c.l.b16 %v375
        %v479 = vunpack.c.h.b16 %v375
        %v480 = vunpack.c.l.b16 %v376
        %v481 = vunpack.c.h.b16 %v376
        %v482 = vunpack.c.l.b16 %v377
        %v483 = vunpack.c.h.b16 %v377
        %v484 = vunpack.c.l.b16 %v378
        %v485 = vunpack.c.h.b16 %v378
        %v486 = vunpack.c.l.b16 %v379
        %v487 = vunpack.c.h.b16 %v379
        %v488 = vunpack.c.l.b16 %v380
        %v489 = vunpack.c.h.b16 %v380
        %v490 = vunpack.c.l.b16 %v381
        %v491 = vunpack.c.h.b16 %v381
        %v492 = vunpack.c.l.b16 %v382
        %v493 = vunpack.c.h.b16 %v382
        %v494 = vunpack.c.l.b16 %v383
        %v495 = vunpack.c.h.b16 %v383
        %v496 = vunpack.c.l.b16 %v384
        %v497 = vunpack.c.h.b16 %v384
        %v498 = vunpack.c.l.b16 %v385
        %v499 = vunpack.c.h.b16 %v385
        %v500 = vunpack.c.l.b16 %v386
        %v501 = vunpack.c.h.b16 %v386
        %v502 = vunpack.c.l.b16 %v387
        %v503 = vunpack.c.h.b16 %v387
        %v504 = vunpack.c.l.b16 %v388
        %v505 = vunpack.c.h.b16 %v388
        %v506 = vunpack.c.l.b16 %v389
        %v507 = vunpack.c.h.b16 %v389
        %v508 = vunpack.c.l.b16 %v390
        %v509 = vunpack.c.h.b16 %v390
        %v510 = vunpack.c.l.b16 %v391
        %v511 = vunpack.c.h.b16 %v391
        %v512 = vunpack.c.l.b16 %v392
        %v513 = vunpack.c.h.b16 %v392
        %v514 = vunpack.c.l.b16 %v393
        %v515 = vunpack.c.h.b16 %v393
        %v516 = vunpack.c.l.b16 %v394
        %v517 = vunpack.c.h.b16 %v394
        %v518 = vunpack.c.l.b16 %v395
        %v519 = vunpack.c.h.b16 %v395
        %v520 = vunpack.c.l.b16 %v396
        %v521 = vunpack.c.h.b16 %v396
        %v522 = vunpack.c.l.b16 %v397
        %v523 = vunpack.c.h.b16 %v397
        %v524 = vunpack.c.l.b16 %v398
        %v525 = vunpack.c.h.b16 %v398
        %v526 = vunpack.c.l.b16 %v399
        %v527 = vunpack.c.h.b16 %v399
        %v528 = vunpack.c.l.b16 %v400
        %v529 = vunpack.c.h.b16 %v400
        %v530 = vunpack.c.l.b16 %v401
        %v531 = vunpack.c.h.b16 %v401
        %v532 = vunpack.c.l.b16 %v402
        %v533 = vunpack.c.h.b16 %v402
        %v534 = vunpack.c.l.b16 %v403
        %v535 = vunpack.c.h.b16 %v403
        %v536 = vunpack.c.l.b16 %v404
        %v537 = vunpack.c.h.b16 %v404
        %v538 = vunpack.c.l.b16 %v405
        %v539 = vunpack.c.h.b16 %v405
        %v540 = vunpack.c.l.b16 %v406
        %v541 = vunpack.c.h.b16 %v406
        %v542 = vunpack.c.l.b16 %v407
        %v543 = vunpack.c.h.b16 %v407
        %v544 = vunpack.c.l.b16 %v408
        %v545 = vunpack.c.h.b16 %v408
        %v546 = vunpack.c.l.b16 %v409
        %v547 = vunpack.c.h.b16 %v409
        %v548 = vunpack.c.l.b16 %v410
        %v549 = vunpack.c.h.b16 %v410
        %v550 = vunpack.c.l.b16 %v411
        %v551 = vunpack.c.h.b16 %v411
        %v552 = vunpack.c.l.b16 %v412
        %v553 = vunpack.c.h.b16 %v412
        %v554 = vunpack.c.l.b16 %v413
        %v555 = vunpack.c.h.b16 %v413
        %v556 = vunpack.c.l.b16 %v414
        %v557 = vunpack.c.h.b16 %v414
        %v558 = vunpack.c.l.b16 %v415
        %v559 = vunpack.c.h.b16 %v415
        %v560 = vunpack.c.l.b16 %v416
        %v561 = vunpack.c.h.b16 %v416
        %v562 = vunpack.c.l.b16 %v417
        %v563 = vunpack.c.h.b16 %v417
        %v564 = vunpack.c.l.b16 %v418
        %v565 = vunpack.c.h.b16 %v418
        %v566 = vunpack.c.l.b16 %v419
        %v567 = vunpack.c.h.b16 %v419
        %v568 = vunpack.c.l.b16 %v420
        %v569 = vunpack.c.h.b16 %v420
        %v570 = vunpack.c.l.b16 %v421
        %v571 = vunpack.c.h.b16 %v421
        %v572 = vunpack.c.l.b16 %v422
        %v573 = vunpack.c.h.b16 %v422
        %v574 = vpack.c.b16 %v480, %v478
        %v575 = vpack.c.b16 %v481, %v479
        %v576 = vpack.c.b16 %v484, %v482
        %v577 = vpack.c.b16 %v485, %v483
        %v578 = vpack.c.b16 %v488, %v486
        %v579 = vpack.c.b16 %v489, %v487
        %v580 = vpack.c.b16 %v492, %v490
        %v581 = vpack.c.b16 %v493, %v491
        %v582 = vpack.c.b16 %v496, %v494
        %v583 = vpack.c.b16 %v497, %v495
        %v584 = vpack.c.b16 %v500, %v498
        %v585 = vpack.c.b16 %v501, %v499
        %v586 = vpack.c.b16 %v504, %v502
        %v587 = vpack.c.b16 %v505, %v503
        %v588 = vpack.c.b16 %v508, %v506
        %v589 = vpack.c.b16 %v509, %v507
        %v590 = vpack.c.b16 %v512, %v510
        %v591 = vpack.c.b16 %v513, %v511
        %v592 = vpack.c.b16 %v516, %v514
        %v593 = vpack.c.b16 %v517, %v515
        %v594 = vpack.c.b16 %v520, %v518
        %v595 = vpack.c.b16 %v521, %v519
        %v596 = vpack.c.b16 %v524, %v522
        %v597 = vpack.c.b16 %v525, %v523
        %v598 = vpack.c.b16 %v528, %v526
        %v599 = vpack.c.b16 %v529, %v527
        %v600 = vpack.c.b16 %v532, %v530
        %v601 = vpack.c.b16 %v533, %v531
        %v602 = vpack.c.b16 %v536, %v534
        %v603 = vpack.c.b16 %v537, %v535
        %v604 = vpack.c.b16 %v540, %v538
        %v605 = vpack.c.b16 %v541, %v539
        %v606 = vpack.c.b16 %v544, %v542
        %v607 = vpack.c.b16 %v545, %v543
        %v608 = vpack.c.b16 %v548, %v546
        %v609 = vpack.c.b16 %v549, %v547
        %v610 = vpack.c.b16 %v552, %v550
        %v611 = vpack.c.b16 %v553, %v551
        %v612 = vpack.c.b16 %v556, %v554
        %v613 = vpack.c.b16 %v557, %v555
        %v614 = vpack.c.b16 %v560, %v558
        %v615 = vpack.c.b16 %v561, %v559
        %v616 = vpack.c.b16 %v564, %v562
        %v617 = vpack.c.b16 %v565, %v563
        %v618 = vpack.c.b16 %v568, %v566
        %v619 = vpack.c.b16 %v569, %v567
        %v620 = vpack.c.b16 %v572, %v570
        %v621 = vpack.c.b16 %v573, %v571
        %670 = vmatprep.subr.bf16.mxu0 %v575
        %671 = vmatpush1.bf16.xpose.msra.mxu0 %v574
        %672 = vmatprep.subr.bf16.mxu0 %v577
        %673 = vmatpush1.bf16.xpose.msra.mxu0 %v576
        %674 = vmatprep.subr.bf16.mxu0 %v579
        %675 = vmatpush1.bf16.xpose.msra.mxu0 %v578
        %676 = vmatprep.subr.bf16.mxu0 %v581
        %677 = vmatpush1.bf16.xpose.msra.mxu0 %v580
        %678 = vmatprep.subr.bf16.mxu0 %v583
        %679 = vmatpush1.bf16.xpose.msra.mxu0 %v582
        %680 = vmatprep.subr.bf16.mxu0 %v585
        %681 = vmatpush1.bf16.xpose.msra.mxu0 %v584
        %682 = vmatprep.subr.bf16.mxu0 %v587
        %683 = vmatpush1.bf16.xpose.msra.mxu0 %v586
        %684 = vmatprep.subr.bf16.mxu0 %v589
        %685 = vmatpush1.bf16.xpose.msra.mxu0 %v588
        %686 = vmatprep.subr.bf16.mxu0 %v591
        %687 = vmatpush1.bf16.xpose.msra.mxu0 %v590
        %688 = vmatprep.subr.bf16.mxu0 %v593
        %689 = vmatpush1.bf16.xpose.msra.mxu0 %v592
        %690 = vmatprep.subr.bf16.mxu0 %v595
        %691 = vmatpush1.bf16.xpose.msra.mxu0 %v594
        %692 = vmatprep.subr.bf16.mxu0 %v597
        %693 = vmatpush1.bf16.xpose.msra.mxu0 %v596
        %694 = vmatprep.subr.bf16.mxu0 %v599
        %695 = vmatpush1.bf16.xpose.msra.mxu0 %v598
        %696 = vmatprep.subr.bf16.mxu0 %v601
        %697 = vmatpush1.bf16.xpose.msra.mxu0 %v600
        %698 = vmatprep.subr.bf16.mxu0 %v603
        %699 = vmatpush1.bf16.xpose.msra.mxu0 %v602
        %700 = vmatprep.subr.bf16.mxu0 %v605
        %701 = vmatpush1.bf16.xpose.msra.mxu0 %v604
        %702 = vmatprep.mubr.bf16.mxu0 %v427
        %703 = vmatmul.mubr.bf16.gmra.mrb[0].mxu0 %v426
        %v704 = vpop.f32.mrb[0].mxu0
        %v705 = vadd.f32 0.0, %v704
        %v706 = vpop.f32.mrb[0].mxu0
        %v707 = vadd.f32 0.0, %v706
        %v708 = vpop.f32.mrb[0].mxu0
        %v709 = vpop.f32.mrb[0].mxu0
        %710 = vdwg.mxu0
        %711 = vmatprep.subr.bf16.mxu0 %v607
        %712 = vmatpush1.bf16.xpose.msra.mxu0 %v606
        %713 = vmatprep.subr.bf16.mxu0 %v609
        %714 = vmatpush1.bf16.xpose.msra.mxu0 %v608
        %715 = vmatprep.subr.bf16.mxu0 %v611
        %716 = vmatpush1.bf16.xpose.msra.mxu0 %v610
        %717 = vmatprep.subr.bf16.mxu0 %v613
        %718 = vmatpush1.bf16.xpose.msra.mxu0 %v612
        %719 = vmatprep.subr.bf16.mxu0 %v615
        %720 = vmatpush1.bf16.xpose.msra.mxu0 %v614
        %721 = vmatprep.subr.bf16.mxu0 %v617
        %722 = vmatpush1.bf16.xpose.msra.mxu0 %v616
        %723 = vmatprep.subr.bf16.mxu0 %v619
        %724 = vmatpush1.bf16.xpose.msra.mxu0 %v618
        %725 = vmatprep.subr.bf16.mxu0 %v621
        %726 = vmatpush1.bf16.xpose.msra.mxu0 %v620
        %727 = vmatprep.subr.bf16.mxu0 0
        %728 = vmatpush1.bf16.xpose.msra.mxu0 0
        %729 = vmatprep.subr.bf16.mxu0 0
        %730 = vmatpush1.bf16.xpose.msra.mxu0 0
        %731 = vmatprep.subr.bf16.mxu0 0
        %732 = vmatpush1.bf16.xpose.msra.mxu0 0
        %733 = vmatprep.subr.bf16.mxu0 0
        %734 = vmatpush1.bf16.xpose.msra.mxu0 0
        %735 = vmatprep.subr.bf16.mxu0 0
        %736 = vmatpush1.bf16.xpose.msra.mxu0 0
        %737 = vmatprep.subr.bf16.mxu0 0
        %738 = vmatpush1.bf16.xpose.msra.mxu0 0
        %739 = vmatprep.subr.bf16.mxu0 0
        %740 = vmatpush1.bf16.xpose.msra.mxu0 0
        %741 = vmatprep.subr.bf16.mxu0 0
        %742 = vmatpush1.bf16.xpose.msra.mxu0 0
        %743 = vmatprep.mubr.bf16.mxu0 %v427
        %744 = vmatmul.mubr.bf16.gmra.mrb[0].mxu0 %v426
        %v745 = vpop.f32.mrb[0].mxu0
        %v746 = vadd.f32 0.0, %v745
        %v747 = vpop.f32.mrb[0].mxu0
        %v748 = vpop.f32.mrb[0].mxu0
        %v749 = vpop.f32.mrb[0].mxu0
        %750 = vdwg.mxu0
        %v751 = vadd.f32 %v371, %v705
        %v752 = vadd.f32 %v372, %v707
        %v753 = vadd.f32 %v373, %v746
        %754 = vst [vmem:[%s308] sm:$0xff] %v751
        %755 = vst [vmem:[%s308 + $0x8] sm:$0xff] %v752
        %756 = vst [vmem:[%s308 + $0x10] sm:$0xff] %v753
        // Predicated region
        $region49: #{tpu_custom_call.1} parent=31 // pred_check
          %p757 = pneg %p340
        $region50: #{tpu_custom_call.1} parent=31 // pred_check_branch
          %759 = sbr.rel (%p757) target = $region52
        $region51: #{tpu_custom_call.1} parent=31 // pred_region
          %v760 = vld [vmem:[%s308] sm:$0xff]
          %v761 = vld [vmem:[%s308 + $0x8] sm:$0xff]
          %v762 = vld [vmem:[%s308 + $0x10] sm:$0xff]
          %v763 = vld [vmem:[%s333] sm:$0xff]
          %v764 = vmax.f32 %v760, %v761
          %v765 = vmax.f32 %v764, %v762
          %766 = vmax.xlane.f32.xlu0 %v765
          %v767 = vpop.xlane.xlu0 %766
          %v768 = vmax.f32 %v763, %v767
          %v769 = vld [vmem:[%s337] sm:$0xff]
          %v770 = vsub.f32 %v763, %v768
          %v771 = vmul.f32 %v770, 1.442695
          %v772 = vpow.pop %v771
          %v773 = vmul.f32 %v769, %v772
          %775 = vset.pattern.permute.xlu0 0
          %776 = vperm.xlu0 %775, %v768
          %v777 = vpop.permute.xlu0 %776
          %v779 = vsub.f32 %v760, %v777
          %v780 = vsub.f32 %v761, %v777
          %v781 = vsub.f32 %v762, %v777
          %v782 = vmul.f32 %v779, 1.442695
          %v783 = vpow.pop %v782
          %v784 = vmul.f32 %v780, 1.442695
          %v785 = vpow.pop %v784
          %v786 = vmul.f32 %v781, 1.442695
          %v787 = vpow.pop %v786
          %v788 = vadd.f32 %v783, %v785
          %v789 = vadd.f32 %v788, %v787
          %790 = vadd.xlane.f32.xlu0 %v789
          %v791 = vpop.xlane.xlu0 %790
          %v792 = vadd.f32 %v773, %v791
          %vm793 = vcmask 7168
          %794 = vst.msk [vmem:[%s337] sm:$0xff] %vm793, %v792
          %795 = vst.msk [vmem:[%s333] sm:$0xff] %vm793, %v768
        $region52: #{tpu_custom_call.1} parent=31 // pred_fallthru
          _
        %s796 = sand.u32 %s135, 1
        %s797 = scalar_lea.sflag [#allocation4], %s796
        %s798 = sand.u32 %s135, 1
        %s799 = smul.addr %s798, 24
        %s800 = scalar_lea.vmem [#allocation7], %s799
        %p801 = scmp.lt.s32.totalorder %s29, 1
        %s802 = scalar_select %p801, %s29, 1
        %s803 = smul.addr %s802, 8
        %s804 = scalar_lea.vmem %s4, %s803
        %p805 = scmp.lt.s32.totalorder %s29, 1
        %s806 = scalar_select %p805, %s29, 1
        %s807 = smul.addr %s806, 8
        %s808 = scalar_lea.vmem %s5, %s807
        // Predicated region
        $region53: #{tpu_custom_call.1} parent=31 // pred_check
          %p809 = pneg %p145
        $region54: #{tpu_custom_call.1} parent=31 // pred_check_branch
          %811 = sbr.rel (%p809) target = $region56
        $region55: #{tpu_custom_call.1} parent=31 // pred_region
          %s812 = smul.u32 3, %s30
          %s814 = ssub.s32 384, 384
          %815 = vsyncadd %s797, %s814
          %s816 = smul.addr %s29, 3
          %s817 = sadd.s32 %s812, %s816
          %s818 = smul.addr %s817, 128
          %s819 = scalar_lea.hbm %s3, %s818
          %s821 = sshll.u32 %s800, 4
          %s822 = int_to_ptr.vmem [resolvable:$true] %s821
          %824 = dma.vmem_to_hbm [thread:$0]  %s822, 384, %s819, %s797
        $region56: #{tpu_custom_call.1} parent=31 // pred_fallthru
          _
        // Predicated region
        $region57: #{tpu_custom_call.1} parent=31 // pred_check
          %p825 = pneg %p171
        $region58: #{tpu_custom_call.1} parent=31 // pred_check_branch
          %827 = sbr.rel (%p825) target = $region60
        $region59: #{tpu_custom_call.1} parent=31 // pred_region
          _
        $region60: #{tpu_custom_call.1} parent=31 // pred_fallthru
          _
        // Predicated region
        $region61: #{tpu_custom_call.1} parent=31 // pred_check
          %p828 = pneg %p197
        $region62: #{tpu_custom_call.1} parent=31 // pred_check_branch
          %830 = sbr.rel (%p828) target = $region64
        $region63: #{tpu_custom_call.1} parent=31 // pred_region
          _
        $region64: #{tpu_custom_call.1} parent=31 // pred_fallthru
          _
      $region32: #{tpu_custom_call.1} parent=5 // pred_fallthru
        _
      %p831 = scmp.le.s32.totalorder 2, %s19
      // Predicated region
      $region65: #{tpu_custom_call.1} parent=5 // pred_check
        %p832 = pneg %p831
      $region66: #{tpu_custom_call.1} parent=5 // pred_check_branch
        %834 = sbr.rel (%p832) target = $region68
      $region67: #{tpu_custom_call.1} parent=5 // pred_region
        %s835 = ssub.s32 %s19, 2
        // Predicated region
        $region69: #{tpu_custom_call.1} parent=67 // pred_check
          %p836 = pneg %p151
        $region70: #{tpu_custom_call.1} parent=67 // pred_check_branch
          %838 = sbr.rel (%p836) target = $region72
        $region71: #{tpu_custom_call.1} parent=67 // pred_region
          %s839 = sand.u32 %s136, 1
          %s840 = scalar_lea.sflag [#allocation4], %s839
          %s841 = sand.u32 %s136, 1
          %s842 = smul.addr %s841, 24
          %s843 = scalar_lea.vmem [#allocation7], %s842
          %844 = dma.done %s840, 384
        $region72: #{tpu_custom_call.1} parent=67 // pred_fallthru
          _
        // Predicated region
        $region73: #{tpu_custom_call.1} parent=67 // pred_check
          %p845 = pneg %p177
        $region74: #{tpu_custom_call.1} parent=67 // pred_check_branch
          %847 = sbr.rel (%p845) target = $region76
        $region75: #{tpu_custom_call.1} parent=67 // pred_region
          %p848 = scmp.lt.s32.totalorder %s32, 1
          %s849 = scalar_select %p848, %s32, 1
          %s850 = smul.addr %s849, 8
          %s851 = scalar_lea.vmem %s4, %s850
        $region76: #{tpu_custom_call.1} parent=67 // pred_fallthru
          _
        // Predicated region
        $region77: #{tpu_custom_call.1} parent=67 // pred_check
          %p852 = pneg %p203
        $region78: #{tpu_custom_call.1} parent=67 // pred_check_branch
          %854 = sbr.rel (%p852) target = $region80
        $region79: #{tpu_custom_call.1} parent=67 // pred_region
          %p855 = scmp.lt.s32.totalorder %s32, 1
          %s856 = scalar_select %p855, %s32, 1
          %s857 = smul.addr %s856, 8
          %s858 = scalar_lea.vmem %s5, %s857
        $region80: #{tpu_custom_call.1} parent=67 // pred_fallthru
          _
      $region68: #{tpu_custom_call.1} parent=5 // pred_fallthru
        _
    $region6: #{tpu_custom_call.1} parent=1 // loop_footer
      %s23 = sadd.s32 1, %s19
    $region7: #{tpu_custom_call.1} parent=1 // loop_footer_branch
      %18 = sbr.rel target = $region3
    $region8: #{tpu_custom_call.1} parent=1 // loop_exit
      _
    %859 = vsyncpa [#allocation3], 1
    %s860 = scalar_lea.sflag [#allocation3], 1
    %861 = vsyncpa %s860, 1
    %862 = vsyncpa [#allocation6], 1
    %863 = vsyncpa [#allocation4], 1
    %s864 = scalar_lea.sflag [#allocation4], 1
    %865 = vsyncpa %s864, 1

</llo_original>
